<compile_context>
chip_gen: v7x
topology: tpu7x:2x2x1
jax: 0.10.0
libtpu: 0.0.40
codegen_flags: <defaults>
</compile_context>

<pallas_src>
import jax
import jax.numpy as jnp
from jax import lax
from jax.experimental import pallas as pl
from jax.experimental.pallas import tpu as pltpu


# ----------------------------- Pallas kernel ------------------------------ #
def lstm_recurrence_kernel(maxlen_ref, lengths_ref, xproj_ref, w_hh_ref,
                           last_ref, h_ref, c_ref):
    """One (batch block, time tile): serial LSTM steps + last-valid capture.

    maxlen_ref : (num_b_blocks,) int32 in SMEM (scalar prefetch)
    lengths_ref: (1, BB) int32          -- valid lengths, batch on lanes
    xproj_ref  : (TT, 4H, BB) f32       -- x @ W_ih^T + b, gates [i|f|o|g]
    w_hh_ref   : (4H, H) f32            -- recurrent weight, rows [i|f|o|g]
    last_ref   : (H, BB) f32 output     -- resident across the time axis
    h_ref,c_ref: (H, BB) f32 scratch    -- carried LSTM state
    """
    H, _ = h_ref.shape
    tb = pl.program_id(1)
    T_TILE = xproj_ref.shape[0]

    @pl.when(tb == 0)
    def _():
        h_ref[...] = jnp.zeros_like(h_ref)
        c_ref[...] = jnp.zeros_like(c_ref)
        last_ref[...] = jnp.zeros_like(last_ref)

    # Loop-invariant loads hoisted out of the recurrence.
    lengths = lengths_ref[...]                           # (1, BB) int32
    w_hh = w_hh_ref[...]                                 # (4H, H)

    # Only run steps up to the longest sequence in this batch block.
    t0 = tb * T_TILE
    max_len = maxlen_ref[pl.program_id(0)]
    n_steps = jnp.clip(max_len - t0, 0, T_TILE)

    def body(s, carry):
        h, c, last = carry
        # Single (4H, H) @ (H, BB) MXU matmul per step; the input projection
        # was hoisted out of the loop.  Batch on lanes -> lane-dense output.
        gates = xproj_ref[s] + jnp.dot(w_hh, h,
                                       preferred_element_type=jnp.float32)
        # Gate rows ordered [i | f | o | g]: one wide sigmoid, one tanh.
        ifo = jax.nn.sigmoid(gates[0:3 * H, :])
        g = jnp.tanh(gates[3 * H:4 * H, :])
        i_g = ifo[0 * H:1 * H, :]
        f_g = ifo[1 * H:2 * H, :]
        o_g = ifo[2 * H:3 * H, :]
        c_new = f_g * c + i_g * g
        h_new = o_g * jnp.tanh(c_new)
        # out[i, lengths[i]-1]  <=>  keep h at global step t where length==t+1.
        last_new = jnp.where(lengths == (t0 + s + 1), h_new, last)
        return h_new, c_new, last_new

    h, c, last = lax.fori_loop(0, n_steps, body,
                               (h_ref[...], c_ref[...], last_ref[...]))
    h_ref[...] = h
    c_ref[...] = c
    last_ref[...] = last


# ------------------------------- wrapper ---------------------------------- #
def _round_up(x, m):
    return ((x + m - 1) // m) * m


def lstm_without_attention(x_tokens, lengths, params, *, block_b=128,
                           block_t=32):
    """x_tokens: (B, T) int32 token ids; lengths: (B,) int32 valid lengths."""
    B, T = x_tokens.shape
    H4, H = params["w_hh_g"].shape
    O = params["w_fc"].shape[1]

    # Glue in plain JAX: embedding gather + input projection hoisted out of
    # the recurrence as ONE batched matmul, emitted directly in the kernel's
    # transposed (T, 4H, B) layout (no in-kernel transpose).
    emb = params["embedding"][x_tokens]                              # (B, T, E)
    xprojT = (jnp.einsum("bte,ge->tgb", emb, params["w_ih_g"],
                         preferred_element_type=jnp.float32)
              + params["b_g"][None, :, None])                        # (T, 4H, B)

    # Batch block: lane axis, so it must be a multiple of 128 or the full dim.
    if B >= block_b:
        BB = block_b
        B_pad = _round_up(B, BB)
    else:
        B_pad = _round_up(B, 8)
        BB = B_pad
    # Time tile: keeps VMEM flat in T and pipelines the xproj DMA.
    TT = min(block_t, T)
    T_pad = _round_up(T, TT)

    lengths_i32 = lengths.astype(jnp.int32)
    if B_pad != B or T_pad != T:
        xprojT = jnp.pad(xprojT, ((0, T_pad - T), (0, 0), (0, B_pad - B)))
        lengths_i32 = jnp.pad(lengths_i32, (0, B_pad - B))
    lengths_2d = lengths_i32.reshape(1, B_pad)

    num_b = B_pad // BB
    num_t = T_pad // TT
    # Per-block longest sequence (scalar prefetch -> SMEM).  Padded rows have
    # length 0 and therefore never update `last` (they are sliced off below).
    block_maxlen = jnp.max(lengths_i32.reshape(num_b, BB), axis=1)

    last_hb = pl.pallas_call(
        lstm_recurrence_kernel,
        out_shape=jax.ShapeDtypeStruct((H, B_pad), jnp.float32),
        grid_spec=pltpu.PrefetchScalarGridSpec(
            num_scalar_prefetch=1,
            grid=(num_b, num_t),
            in_specs=[
                pl.BlockSpec((1, BB), lambda b, t, ml: (0, b)),       # lengths
                pl.BlockSpec((TT, H4, BB), lambda b, t, ml: (t, 0, b)),  # xproj
                pl.BlockSpec((H4, H), lambda b, t, ml: (0, 0)),       # W_hh
            ],
            out_specs=pl.BlockSpec((H, BB), lambda b, t, ml: (0, b)),
            scratch_shapes=[pltpu.VMEM((H, BB), jnp.float32),         # h
                            pltpu.VMEM((H, BB), jnp.float32)],        # c
        ),
        compiler_params=pltpu.CompilerParams(
            dimension_semantics=("parallel", "arbitrary")),
    )(block_maxlen, lengths_2d, xprojT, params["w_hh_g"])

    # Final FC as one lane-dense batched matmul in the wrapper.
    last_bh = last_hb.T[:B]                                           # (B, H)
    return last_bh @ params["w_fc"] + params["b_fc"]


# --------------------------- param construction --------------------------- #
def make_params(key, vocab_size, embedding_dim, hidden_size, output_size):
    ks = jax.random.split(key, 7)
    H = hidden_size
    bound = 1.0 / jnp.sqrt(H)

    emb = jax.random.normal(ks[0], (vocab_size, embedding_dim), jnp.float32)
    emb = emb.at[0].set(0.0)                            # padding_idx=0

    # PyTorch layout: weight_ih (4H, E), weight_hh (4H, H), biases (4H,)
    # with gate row-blocks ordered [i; f; g; o].
    w_ih_pt = jax.random.uniform(ks[1], (4 * H, embedding_dim), jnp.float32,
                                 -bound, bound)
    w_hh_pt = jax.random.uniform(ks[2], (4 * H, H), jnp.float32, -bound, bound)
    b_ih_pt = jax.random.uniform(ks[3], (4 * H,), jnp.float32, -bound, bound)
    b_hh_pt = jax.random.uniform(ks[4], (4 * H,), jnp.float32, -bound, bound)

    # Reorder gate row-blocks to [i; f; o; g] so the kernel can apply one wide
    # sigmoid over rows [0, 3H) and one tanh over rows [3H, 4H).
    perm = jnp.concatenate([jnp.arange(0, H), jnp.arange(H, 2 * H),
                            jnp.arange(3 * H, 4 * H), jnp.arange(2 * H, 3 * H)])
    w_ih_g = w_ih_pt[perm]                              # (4H, E)
    w_hh_g = w_hh_pt[perm]                              # (4H, H)
    b_g = (b_ih_pt + b_hh_pt)[perm]                     # (4H,)

    fc_bound = 1.0 / jnp.sqrt(H)
    w_fc_pt = jax.random.uniform(ks[5], (output_size, H), jnp.float32,
                                 -fc_bound, fc_bound)
    b_fc_pt = jax.random.uniform(ks[6], (output_size,), jnp.float32,
                                 -fc_bound, fc_bound)

    return {"embedding": emb, "w_ih_g": w_ih_g, "w_hh_g": w_hh_g, "b_g": b_g,
            "w_fc": w_fc_pt.T, "b_fc": b_fc_pt.reshape(1, output_size)}


# ------------------------- pure-JAX reference ------------------------------ #
def reference(x_tokens, lengths, params):
    emb = params["embedding"][x_tokens]                 # (B, T, E)
    B, T, _ = emb.shape
    H = params["w_hh_g"].shape[1]
    w_ih_t = params["w_ih_g"].T                         # (E, 4H) cols [i|f|o|g]
    w_hh_t = params["w_hh_g"].T                         # (H, 4H)
    b = params["b_g"]

    def step(carry, x_t):
        h, c = carry
        gates = x_t @ w_ih_t + h @ w_hh_t + b
        i = jax.nn.sigmoid(gates[:, 0 * H:1 * H])
        f = jax.nn.sigmoid(gates[:, 1 * H:2 * H])
        o = jax.nn.sigmoid(gates[:, 2 * H:3 * H])
        g = jnp.tanh(gates[:, 3 * H:4 * H])
        c = f * c + i * g
        h = o * jnp.tanh(c)
        return (h, c), h

    (_, _), hs = lax.scan(step, (jnp.zeros((B, H)), jnp.zeros((B, H))),
                          jnp.transpose(emb, (1, 0, 2)))
    hs = jnp.transpose(hs, (1, 0, 2))                   # (B, T, H)
    last = hs[jnp.arange(B), lengths - 1]               # (B, H)
    return last @ params["w_fc"] + params["b_fc"]


# --------------------------------- main ------------------------------------ #
if __name__ == "__main__":
    vocab_size, embedding_dim, hidden_size, output_size = 50, 16, 32, 8
    B, T = 4, 10

    key = jax.random.PRNGKey(0)
    k_p, k_tok, k_len = jax.random.split(key, 3)

    params = make_params(k_p, vocab_size, embedding_dim, hidden_size,
                         output_size)

    lengths = jax.random.randint(k_len, (B,), 1, T + 1, dtype=jnp.int32)
    tokens = jax.random.randint(k_tok, (B, T), 1, vocab_size, dtype=jnp.int32)
    # Zero-pad tokens beyond each sequence length (padding_idx=0).
    pad_mask = jnp.arange(T)[None, :] < lengths[:, None]
    tokens = jnp.where(pad_mask, tokens, 0)

    out = lstm_without_attention(tokens, lengths, params)
    out = jax.block_until_ready(out)

    ref = reference(tokens, lengths, params)
    assert out.shape == (B, output_size)
    assert jnp.allclose(out, ref, atol=1e-4, rtol=1e-4), (out, ref)

    print("KERNEL_OK")
</pallas_src>

<mosaic_0001>
module attributes {stable_mosaic.version = 11 : i64} {
  func.func @lstm_recurrence_kernel(%arg0: i32, %arg1: i32, %arg2: memref<1xi32, #tpu.memory_space<smem>>, %arg3: memref<1x8xi32, #tpu.memory_space<vmem>>, %arg4: memref<10x128x8xf32, #tpu.memory_space<vmem>>, %arg5: memref<128x32xf32, #tpu.memory_space<vmem>>, %arg6: memref<32x8xf32, #tpu.memory_space<vmem>>, %arg7: memref<32x8xf32, #tpu.memory_space<vmem>>, %arg8: memref<32x8xf32, #tpu.memory_space<vmem>>) attributes {dimension_semantics = [#tpu.dimension_semantics<parallel>, #tpu.dimension_semantics<arbitrary>], iteration_bounds = array<i64: 1, 1>, scalar_prefetch = 1 : i64, scratch_operands = 2 : i64, tpu.core_type = #tpu.core_type<tc>, window_params = [{transform_indices = @transform_0, window_bounds = array<i64: 1, 8>}, {transform_indices = @transform_1, window_bounds = array<i64: 10, 128, 8>}, {pipeline_mode = #tpu.pipeline_mode<synchronous>, transform_indices = @transform_2, window_bounds = array<i64: 128, 32>}, {transform_indices = @transform_3, window_bounds = array<i64: 32, 8>}]} {
    %c0_i32 = arith.constant 0 : i32
    %0 = arith.cmpi eq, %arg1, %c0_i32 : i32
    %1 = arith.extui %0 : i1 to i32
    %c0_i32_0 = arith.constant 0 : i32
    %2 = arith.cmpi ne, %1, %c0_i32_0 : i32
    scf.if %2 {
      %cst = arith.constant 0.000000e+00 : f32
      %20 = vector.broadcast %cst : f32 to vector<32x8xf32>
      %c0_19 = arith.constant 0 : index
      %c0_20 = arith.constant 0 : index
      %21 = vector.load %arg7[%c0_19, %c0_20] : memref<32x8xf32, #tpu.memory_space<vmem>>, vector<32x8xf32>
      tpu.vector_store %arg7[%c0_19, %c0_20], %20 {strides = array<i32>} : memref<32x8xf32, #tpu.memory_space<vmem>>, vector<32x8xf32>,
      %cst_21 = arith.constant 0.000000e+00 : f32
      %22 = vector.broadcast %cst_21 : f32 to vector<32x8xf32>
      %c0_22 = arith.constant 0 : index
      %c0_23 = arith.constant 0 : index
      %23 = vector.load %arg8[%c0_22, %c0_23] : memref<32x8xf32, #tpu.memory_space<vmem>>, vector<32x8xf32>
      tpu.vector_store %arg8[%c0_22, %c0_23], %22 {strides = array<i32>} : memref<32x8xf32, #tpu.memory_space<vmem>>, vector<32x8xf32>,
      %cst_24 = arith.constant 0.000000e+00 : f32
      %24 = vector.broadcast %cst_24 : f32 to vector<32x8xf32>
      %c0_25 = arith.constant 0 : index
      %c0_26 = arith.constant 0 : index
      %25 = vector.load %arg6[%c0_25, %c0_26] : memref<32x8xf32, #tpu.memory_space<vmem>>, vector<32x8xf32>
      tpu.vector_store %arg6[%c0_25, %c0_26], %24 {strides = array<i32>} : memref<32x8xf32, #tpu.memory_space<vmem>>, vector<32x8xf32>,
    } else {
    }
    %c0 = arith.constant 0 : index
    %c0_1 = arith.constant 0 : index
    %3 = vector.load %arg3[%c0, %c0_1] : memref<1x8xi32, #tpu.memory_space<vmem>>, vector<1x8xi32>
    %c0_2 = arith.constant 0 : index
    %c0_3 = arith.constant 0 : index
    %4 = vector.load %arg5[%c0_2, %c0_3] : memref<128x32xf32, #tpu.memory_space<vmem>>, vector<128x32xf32>
    %c10_i32 = arith.constant 10 : i32
    %5 = arith.muli %arg1, %c10_i32 : i32
    %6 = arith.index_cast %arg0 : i32 to index
    %7 = memref.load %arg2[%6] : memref<1xi32, #tpu.memory_space<smem>>
    %8 = arith.subi %7, %5 : i32
    %c0_i32_4 = arith.constant 0 : i32
    %c10_i32_5 = arith.constant 10 : i32
    %9 = arith.maxsi %c0_i32_4, %8 : i32
    %10 = arith.minsi %c10_i32_5, %9 : i32
    %c0_6 = arith.constant 0 : index
    %c0_7 = arith.constant 0 : index
    %11 = vector.load %arg7[%c0_6, %c0_7] : memref<32x8xf32, #tpu.memory_space<vmem>>, vector<32x8xf32>
    %c0_8 = arith.constant 0 : index
    %c0_9 = arith.constant 0 : index
    %12 = vector.load %arg8[%c0_8, %c0_9] : memref<32x8xf32, #tpu.memory_space<vmem>>, vector<32x8xf32>
    %c0_10 = arith.constant 0 : index
    %c0_11 = arith.constant 0 : index
    %13 = vector.load %arg6[%c0_10, %c0_11] : memref<32x8xf32, #tpu.memory_space<vmem>>, vector<32x8xf32>
    %c0_i32_12 = arith.constant 0 : i32
    %14 = arith.subi %10, %c0_i32_12 : i32
    %15 = arith.addi %c0_i32_12, %14 : i32
    %c1_i32 = arith.constant 1 : i32
    %16:3 = scf.for %arg9 = %c0_i32_12 to %15 step %c1_i32 iter_args(%arg10 = %11, %arg11 = %12, %arg12 = %13) -> (vector<32x8xf32>, vector<32x8xf32>, vector<32x8xf32>)  : i32 {
      %20 = arith.index_cast %arg9 : i32 to index
      %c0_19 = arith.constant 0 : index
      %c0_20 = arith.constant 0 : index
      %21 = vector.load %arg4[%20, %c0_19, %c0_20] : memref<10x128x8xf32, #tpu.memory_space<vmem>>, vector<1x128x8xf32>
      %22 = vector.shape_cast %21 : vector<1x128x8xf32> to vector<128x8xf32>
      %cst = arith.constant dense<0.000000e+00> : vector<128x8xf32>
      %23 = tpu.matmul %4, %arg10, %cst {dimension_numbers = #tpu.dot_dimension_numbers<[1], [0], [0], [1], [0, 0, 1, 1], [], []>} : vector<128x32xf32>, vector<32x8xf32>, vector<128x8xf32> -> vector<128x8xf32>
      %24 = arith.addf %22, %23 : vector<128x8xf32>
      %25 = vector.extract_strided_slice %24 {offsets = [0, 0], sizes = [96, 8], strides = [1, 1]} : vector<128x8xf32> to vector<96x8xf32>
      %26 = arith.negf %25 : vector<96x8xf32>
      %27 = math.exp %26 : vector<96x8xf32>
      %cst_21 = arith.constant 1.000000e+00 : f32
      %28 = vector.broadcast %cst_21 : f32 to vector<96x8xf32>
      %29 = arith.addf %28, %27 : vector<96x8xf32>
      %30 = arith.divf %28, %29 : vector<96x8xf32>
      %31 = vector.extract_strided_slice %24 {offsets = [96, 0], sizes = [32, 8], strides = [1, 1]} : vector<128x8xf32> to vector<32x8xf32>
      %32 = math.tanh %31 : vector<32x8xf32>
      %33 = vector.extract_strided_slice %30 {offsets = [0, 0], sizes = [32, 8], strides = [1, 1]} : vector<96x8xf32> to vector<32x8xf32>
      %34 = vector.extract_strided_slice %30 {offsets = [32, 0], sizes = [32, 8], strides = [1, 1]} : vector<96x8xf32> to vector<32x8xf32>
      %35 = vector.extract_strided_slice %30 {offsets = [64, 0], sizes = [32, 8], strides = [1, 1]} : vector<96x8xf32> to vector<32x8xf32>
      %36 = arith.mulf %34, %arg11 : vector<32x8xf32>
      %37 = arith.mulf %33, %32 : vector<32x8xf32>
      %38 = arith.addf %36, %37 : vector<32x8xf32>
      %39 = math.tanh %38 : vector<32x8xf32>
      %40 = arith.mulf %35, %39 : vector<32x8xf32>
      %41 = arith.addi %5, %arg9 : i32
      %c1_i32_22 = arith.constant 1 : i32
      %42 = arith.addi %41, %c1_i32_22 : i32
      %43 = vector.broadcast %42 : i32 to vector<1x8xi32>
      %44 = arith.cmpi eq, %3, %43 : vector<1x8xi32>
      %45 = vector.shape_cast %44 : vector<1x8xi1> to vector<1x8xi1>
      %46 = vector.broadcast %45 : vector<1x8xi1> to vector<32x8xi1>
      %47 = arith.select %46, %40, %arg12 : vector<32x8xi1>, vector<32x8xf32>
      scf.yield %40, %38, %47 : vector<32x8xf32>, vector<32x8xf32>, vector<32x8xf32>
    }
    %c0_13 = arith.constant 0 : index
    %c0_14 = arith.constant 0 : index
    %17 = vector.load %arg7[%c0_13, %c0_14] : memref<32x8xf32, #tpu.memory_space<vmem>>, vector<32x8xf32>
    tpu.vector_store %arg7[%c0_13, %c0_14], %16#0 {strides = array<i32>} : memref<32x8xf32, #tpu.memory_space<vmem>>, vector<32x8xf32>,
    %c0_15 = arith.constant 0 : index
    %c0_16 = arith.constant 0 : index
    %18 = vector.load %arg8[%c0_15, %c0_16] : memref<32x8xf32, #tpu.memory_space<vmem>>, vector<32x8xf32>
    tpu.vector_store %arg8[%c0_15, %c0_16], %16#1 {strides = array<i32>} : memref<32x8xf32, #tpu.memory_space<vmem>>, vector<32x8xf32>,
    %c0_17 = arith.constant 0 : index
    %c0_18 = arith.constant 0 : index
    %19 = vector.load %arg6[%c0_17, %c0_18] : memref<32x8xf32, #tpu.memory_space<vmem>>, vector<32x8xf32>
    tpu.vector_store %arg6[%c0_17, %c0_18], %16#2 {strides = array<i32>} : memref<32x8xf32, #tpu.memory_space<vmem>>, vector<32x8xf32>,
    return
  }
  func.func @transform_0(%arg0: i32, %arg1: i32, %arg2: memref<1xi32, #tpu.memory_space<smem>>) -> (i32, i32) {
    %c0_i32 = arith.constant 0 : i32
    %c0_i32_0 = arith.constant 0 : i32
    return %c0_i32, %arg0 : i32, i32
  }
  func.func @transform_1(%arg0: i32, %arg1: i32, %arg2: memref<1xi32, #tpu.memory_space<smem>>) -> (i32, i32, i32) {
    %c0_i32 = arith.constant 0 : i32
    %c0_i32_0 = arith.constant 0 : i32
    return %arg1, %c0_i32, %arg0 : i32, i32, i32
  }
  func.func @transform_2(%arg0: i32, %arg1: i32, %arg2: memref<1xi32, #tpu.memory_space<smem>>) -> (i32, i32) {
    %c0_i32 = arith.constant 0 : i32
    %c0_i32_0 = arith.constant 0 : i32
    %c0_i32_1 = arith.constant 0 : i32
    return %c0_i32, %c0_i32_0 : i32, i32
  }
  func.func @transform_3(%arg0: i32, %arg1: i32, %arg2: memref<1xi32, #tpu.memory_space<smem>>) -> (i32, i32) {
    %c0_i32 = arith.constant 0 : i32
    %c0_i32_0 = arith.constant 0 : i32
    return %c0_i32, %arg0 : i32, i32
  }
}

</mosaic_0001>

<llo_original>
// kernel: tpu_custom_call.1
$region0: #{tpu_custom_call.1}
  #allocation0 [shape = 'u32[]', space=smem, size = 0x4, offset = 0x4, fixed_abs, tag = 'smem constant byte address 0x4 - core index']
  #allocation1 [shape = 'u32[144,128]{1,0:T(1,128)}', space=vmem, size = 0x12000, scoped, tag = 'internal scratch']
  #allocation2 [shape = 'f32[32,8]{1,0:T(8,128)}', space=vmem, size = 0x4000, scoped, tag = 'scratch operand']
  #allocation3 [shape = 'f32[32,8]{1,0:T(8,128)}', space=vmem, size = 0x4000, scoped, tag = 'scratch operand']
  #allocation4 [shape = 's32[1]{0}', space=sflag, size = 0x4, scoped, tag = 'scoped memory for tpu_custom_call.1']
  #allocation5 [shape = 's32[1]{0:T(128)S(6)}', space=smem, size = 0x200, scoped, tag = 'prefetched SMEM operand 0']
  %s0 = inlined_call_operand.<no memory space> [shape: s32[1], index: 0, kind: input, shape index: {}]
  %s1 = inlined_call_operand.vmem [shape: s32[1,8], index: 1, kind: input, shape index: {}]
  %s2 = inlined_call_operand.vmem [shape: f32[10,128,8], index: 2, kind: input, shape index: {}]
  %s3 = inlined_call_operand.vmem [shape: f32[128,32], index: 3, kind: input, shape index: {}]
  %s4 = inlined_call_operand.vmem [shape: f32[32,8], index: 4, kind: output, shape index: {}]
  %s5 = sld [smem:[#allocation0]]
  $region33: #{tpu_custom_call.1} parent=0
    _
  %s7 = ssub.s32 1, %s5
  %s8 = scalar_select 0, %s7, %s5
  %9 = sst [smem:[#allocation5]] %s0
  // Predicated region
  $region2: #{tpu_custom_call.1} parent=0 // pred_check
    _
  $region3: #{tpu_custom_call.1} parent=0 // pred_check_branch
    %11 = sbr.rel (0) target = $region5
  $region4: #{tpu_custom_call.1} parent=0 // pred_region
    _
  $region5: #{tpu_custom_call.1} parent=0 // pred_fallthru
    _
  // Predicated region
  $region6: #{tpu_custom_call.1} parent=0 // pred_check
    _
  $region7: #{tpu_custom_call.1} parent=0 // pred_check_branch
    %13 = sbr.rel (0) target = $region9
  $region8: #{tpu_custom_call.1} parent=0 // pred_region
    _
  $region9: #{tpu_custom_call.1} parent=0 // pred_fallthru
    _
  // Predicated region
  $region10: #{tpu_custom_call.1} parent=0 // pred_check
    _
  $region11: #{tpu_custom_call.1} parent=0 // pred_check_branch
    %15 = sbr.rel (0) target = $region13
  $region12: #{tpu_custom_call.1} parent=0 // pred_region
    _
  $region13: #{tpu_custom_call.1} parent=0 // pred_fallthru
    _
  %p16 = scmp.eq.s32.totalorder 0, 0
  // Predicated region
  $region14: #{tpu_custom_call.1} parent=0 // pred_check
    %p17 = pneg %p16
  $region15: #{tpu_custom_call.1} parent=0 // pred_check_branch
    %19 = sbr.rel (%p17) target = $region17
  $region16: #{tpu_custom_call.1} parent=0 // pred_region
    %vm20 = vcmask 64512
    %21 = vst.msk [vmem:[#allocation2] sm:$0xff] %vm20, 0.0
    %22 = vst.msk [vmem:[#allocation2 + $0x8] sm:$0xff] %vm20, 0.0
    %23 = vst.msk [vmem:[#allocation2 + $0x10] sm:$0xff] %vm20, 0.0
    %24 = vst.msk [vmem:[#allocation2 + $0x18] sm:$0xff] %vm20, 0.0
    %25 = vst.msk [vmem:[#allocation3] sm:$0xff] %vm20, 0.0
    %26 = vst.msk [vmem:[#allocation3 + $0x8] sm:$0xff] %vm20, 0.0
    %27 = vst.msk [vmem:[#allocation3 + $0x10] sm:$0xff] %vm20, 0.0
    %28 = vst.msk [vmem:[#allocation3 + $0x18] sm:$0xff] %vm20, 0.0
    %29 = vst.msk [vmem:[%s4] sm:$0xff] %vm20, 0.0
    %30 = vst.msk [vmem:[%s4 + $0x8] sm:$0xff] %vm20, 0.0
    %31 = vst.msk [vmem:[%s4 + $0x10] sm:$0xff] %vm20, 0.0
    %32 = vst.msk [vmem:[%s4 + $0x18] sm:$0xff] %vm20, 0.0
  $region17: #{tpu_custom_call.1} parent=0 // pred_fallthru
    _
  %v33 = vld [vmem:[%s1] sm:$0x1]
  %v34 = vld [vmem:[%s3] sm:$0xff]
  %v35 = vld [vmem:[%s3 + $0x8] sm:$0xff]
  %v36 = vld [vmem:[%s3 + $0x10] sm:$0xff]
  %v37 = vld [vmem:[%s3 + $0x18] sm:$0xff]
  %v38 = vld [vmem:[%s3 + $0x20] sm:$0xff]
  %v39 = vld [vmem:[%s3 + $0x28] sm:$0xff]
  %v40 = vld [vmem:[%s3 + $0x30] sm:$0xff]
  %v41 = vld [vmem:[%s3 + $0x38] sm:$0xff]
  %v42 = vld [vmem:[%s3 + $0x40] sm:$0xff]
  %v43 = vld [vmem:[%s3 + $0x48] sm:$0xff]
  %v44 = vld [vmem:[%s3 + $0x50] sm:$0xff]
  %v45 = vld [vmem:[%s3 + $0x58] sm:$0xff]
  %v46 = vld [vmem:[%s3 + $0x60] sm:$0xff]
  %v47 = vld [vmem:[%s3 + $0x68] sm:$0xff]
  %v48 = vld [vmem:[%s3 + $0x70] sm:$0xff]
  %v49 = vld [vmem:[%s3 + $0x78] sm:$0xff]
  %s50 = smul.u32 0, 10
  %s51 = sld [smem:[#allocation5]]
  %s52 = ssub.s32 %s51, %s50
  %p53 = scmp.gt.s32.totalorder %s52, 0
  %s54 = scalar_select %p53, %s52, 0
  %p55 = scmp.lt.s32.totalorder %s54, 10
  %s56 = scalar_select %p55, %s54, 10
  %v57 = vld [vmem:[#allocation2] sm:$0xff]
  %v58 = vld [vmem:[#allocation2 + $0x8] sm:$0xff]
  %v59 = vld [vmem:[#allocation2 + $0x10] sm:$0xff]
  %v60 = vld [vmem:[#allocation2 + $0x18] sm:$0xff]
  %v61 = vld [vmem:[#allocation3] sm:$0xff]
  %v62 = vld [vmem:[#allocation3 + $0x8] sm:$0xff]
  %v63 = vld [vmem:[#allocation3 + $0x10] sm:$0xff]
  %v64 = vld [vmem:[#allocation3 + $0x18] sm:$0xff]
  %v65 = vld [vmem:[%s4] sm:$0xff]
  %v66 = vld [vmem:[%s4 + $0x8] sm:$0xff]
  %v67 = vld [vmem:[%s4 + $0x10] sm:$0xff]
  %v68 = vld [vmem:[%s4 + $0x18] sm:$0xff]
  // While loop
  $region18: #{tpu_custom_call.1} parent=0 // loop_pre_header
    _
  $region19: #{tpu_custom_call.1} parent=0 // loop_header
    %s70 = sphi 0, %s72
    %p71 = scmp.ge.s32.totalorder %s70, %s56
    %v75 = vphi %v57, %v407
    %v76 = vphi %v58, %v408
    %v77 = vphi %v59, %v409
    %v78 = vphi %v60, %v410
    %v79 = vphi %v61, %v399
    %v80 = vphi %v62, %v400
    %v81 = vphi %v63, %v401
    %v82 = vphi %v64, %v402
    %v83 = vphi %v65, %v421
    %v84 = vphi %v66, %v422
    %v85 = vphi %v67, %v423
    %v86 = vphi %v68, %v424
  $region20: #{tpu_custom_call.1} parent=0 // loop_header_branch
    %74 = sbr.rel (%p71) target = $region24
  $region21: #{tpu_custom_call.1} parent=0 // loop_body
    %s87 = smul.u32 %s70, 128
    %s88 = scalar_lea.vmem %s2, %s87
    %v89 = vld [vmem:[%s88] sm:$0xff]
    %v90 = vld [vmem:[%s88 + $0x8] sm:$0xff]
    %v91 = vld [vmem:[%s88 + $0x10] sm:$0xff]
    %v92 = vld [vmem:[%s88 + $0x18] sm:$0xff]
    %v93 = vld [vmem:[%s88 + $0x20] sm:$0xff]
    %v94 = vld [vmem:[%s88 + $0x28] sm:$0xff]
    %v95 = vld [vmem:[%s88 + $0x30] sm:$0xff]
    %v96 = vld [vmem:[%s88 + $0x38] sm:$0xff]
    %v97 = vld [vmem:[%s88 + $0x40] sm:$0xff]
    %v98 = vld [vmem:[%s88 + $0x48] sm:$0xff]
    %v99 = vld [vmem:[%s88 + $0x50] sm:$0xff]
    %v100 = vld [vmem:[%s88 + $0x58] sm:$0xff]
    %v101 = vld [vmem:[%s88 + $0x60] sm:$0xff]
    %v102 = vld [vmem:[%s88 + $0x68] sm:$0xff]
    %v103 = vld [vmem:[%s88 + $0x70] sm:$0xff]
    %v104 = vld [vmem:[%s88 + $0x78] sm:$0xff]
    %vm105 = vcmask 261120
    %v107 = vsel %vm105, %v34, 0
    %v110 = vsel %vm105, %v35, 0
    %v113 = vsel %vm105, %v36, 0
    %v116 = vsel %vm105, %v37, 0
    %v119 = vsel %vm105, %v38, 0
    %v122 = vsel %vm105, %v39, 0
    %v125 = vsel %vm105, %v40, 0
    %v128 = vsel %vm105, %v41, 0
    %v131 = vsel %vm105, %v42, 0
    %v134 = vsel %vm105, %v43, 0
    %v137 = vsel %vm105, %v44, 0
    %v140 = vsel %vm105, %v45, 0
    %v143 = vsel %vm105, %v46, 0
    %v146 = vsel %vm105, %v47, 0
    %v149 = vsel %vm105, %v48, 0
    %v152 = vsel %vm105, %v49, 0
    %154 = vmatprep.subr.mxu0 0.0
    %155 = vmatpush1.msra.mxu0 %v75
    %156 = vmatprep.subr.mxu0 0.0
    %157 = vmatpush1.msra.mxu0 %v76
    %158 = vmatprep.subr.mxu0 0.0
    %159 = vmatpush1.msra.mxu0 %v77
    %160 = vmatprep.subr.mxu0 0.0
    %161 = vmatpush1.msra.mxu0 %v78
    %162 = vmatprep.subr.mxu0 0.0
    %163 = vmatpush1.msra.mxu0 0.0
    %164 = vmatprep.subr.mxu0 0.0
    %165 = vmatpush1.msra.mxu0 0.0
    %166 = vmatprep.subr.mxu0 0.0
    %167 = vmatpush1.msra.mxu0 0.0
    %168 = vmatprep.subr.mxu0 0.0
    %169 = vmatpush1.msra.mxu0 0.0
    %170 = vmatprep.subr.mxu0 0.0
    %171 = vmatpush1.msra.mxu0 0.0
    %172 = vmatprep.subr.mxu0 0.0
    %173 = vmatpush1.msra.mxu0 0.0
    %174 = vmatprep.subr.mxu0 0.0
    %175 = vmatpush1.msra.mxu0 0.0
    %176 = vmatprep.subr.mxu0 0.0
    %177 = vmatpush1.msra.mxu0 0.0
    %178 = vmatprep.subr.mxu0 0.0
    %179 = vmatpush1.msra.mxu0 0.0
    %180 = vmatprep.subr.mxu0 0.0
    %181 = vmatpush1.msra.mxu0 0.0
    %182 = vmatprep.subr.mxu0 0.0
    %183 = vmatpush1.msra.mxu0 0.0
    %184 = vmatprep.subr.mxu0 0.0
    %185 = vmatpush1.msra.mxu0 0.0
    %186 = vmatprep.subr.mxu0 0.0
    %187 = vmatpush1.msra.mxu0 0.0
    %188 = vmatprep.subr.mxu0 0.0
    %189 = vmatpush1.msra.mxu0 0.0
    %190 = vmatprep.subr.mxu0 0.0
    %191 = vmatpush1.msra.mxu0 0.0
    %192 = vmatprep.subr.mxu0 0.0
    %193 = vmatpush1.msra.mxu0 0.0
    %194 = vmatprep.subr.mxu0 0.0
    %195 = vmatpush1.msra.mxu0 0.0
    %196 = vmatprep.subr.mxu0 0.0
    %197 = vmatpush1.msra.mxu0 0.0
    %198 = vmatprep.subr.mxu0 0.0
    %199 = vmatpush1.msra.mxu0 0.0
    %200 = vmatprep.subr.mxu0 0.0
    %201 = vmatpush1.msra.mxu0 0.0
    %202 = vmatprep.subr.mxu0 0.0
    %203 = vmatpush1.msra.mxu0 0.0
    %204 = vmatprep.subr.mxu0 0.0
    %205 = vmatpush1.msra.mxu0 0.0
    %206 = vmatprep.subr.mxu0 0.0
    %207 = vmatpush1.msra.mxu0 0.0
    %208 = vmatprep.subr.mxu0 0.0
    %209 = vmatpush1.msra.mxu0 0.0
    %210 = vmatprep.subr.mxu0 0.0
    %211 = vmatpush1.msra.mxu0 0.0
    %212 = vmatprep.subr.mxu0 0.0
    %213 = vmatpush1.msra.mxu0 0.0
    %214 = vmatprep.subr.mxu0 0.0
    %215 = vmatpush1.msra.mxu0 0.0
    %216 = vmatprep.subr.mxu0 0.0
    %217 = vmatpush1.msra.mxu0 0.0
    %218 = vmatprep.mubr.f32.mxu0 0.0
    %219 = vmatmul.mubr.f32.gmra.mrb[0].mxu0 %v107
    %v220 = vpop.f32.mrb[0].mxu0
    %v221 = vadd.f32 0.0, %v220
    %v222 = vpop.f32.mrb[0].mxu0
    %223 = vmatprep.mubr.f32.mxu0 0.0
    %224 = vmatmul.mubr.f32.gmra.mrb[0].mxu0 %v110
    %v225 = vpop.f32.mrb[0].mxu0
    %v226 = vadd.f32 0.0, %v225
    %v227 = vpop.f32.mrb[0].mxu0
    %228 = vmatprep.mubr.f32.mxu0 0.0
    %229 = vmatmul.mubr.f32.gmra.mrb[0].mxu0 %v113
    %v230 = vpop.f32.mrb[0].mxu0
    %v231 = vadd.f32 0.0, %v230
    %v232 = vpop.f32.mrb[0].mxu0
    %233 = vmatprep.mubr.f32.mxu0 0.0
    %234 = vmatmul.mubr.f32.gmra.mrb[0].mxu0 %v116
    %v235 = vpop.f32.mrb[0].mxu0
    %v236 = vadd.f32 0.0, %v235
    %v237 = vpop.f32.mrb[0].mxu0
    %238 = vmatprep.mubr.f32.mxu0 0.0
    %239 = vmatmul.mubr.f32.gmra.mrb[0].mxu0 %v119
    %v240 = vpop.f32.mrb[0].mxu0
    %v241 = vadd.f32 0.0, %v240
    %v242 = vpop.f32.mrb[0].mxu0
    %243 = vmatprep.mubr.f32.mxu0 0.0
    %244 = vmatmul.mubr.f32.gmra.mrb[0].mxu0 %v122
    %v245 = vpop.f32.mrb[0].mxu0
    %v246 = vadd.f32 0.0, %v245
    %v247 = vpop.f32.mrb[0].mxu0
    %248 = vmatprep.mubr.f32.mxu0 0.0
    %249 = vmatmul.mubr.f32.gmra.mrb[0].mxu0 %v125
    %v250 = vpop.f32.mrb[0].mxu0
    %v251 = vadd.f32 0.0, %v250
    %v252 = vpop.f32.mrb[0].mxu0
    %253 = vmatprep.mubr.f32.mxu0 0.0
    %254 = vmatmul.mubr.f32.gmra.mrb[0].mxu0 %v128
    %v255 = vpop.f32.mrb[0].mxu0
    %v256 = vadd.f32 0.0, %v255
    %v257 = vpop.f32.mrb[0].mxu0
    %258 = vmatprep.mubr.f32.mxu0 0.0
    %259 = vmatmul.mubr.f32.gmra.mrb[0].mxu0 %v131
    %v260 = vpop.f32.mrb[0].mxu0
    %v261 = vadd.f32 0.0, %v260
    %v262 = vpop.f32.mrb[0].mxu0
    %263 = vmatprep.mubr.f32.mxu0 0.0
    %264 = vmatmul.mubr.f32.gmra.mrb[0].mxu0 %v134
    %v265 = vpop.f32.mrb[0].mxu0
    %v266 = vadd.f32 0.0, %v265
    %v267 = vpop.f32.mrb[0].mxu0
    %268 = vmatprep.mubr.f32.mxu0 0.0
    %269 = vmatmul.mubr.f32.gmra.mrb[0].mxu0 %v137
    %v270 = vpop.f32.mrb[0].mxu0
    %v271 = vadd.f32 0.0, %v270
    %v272 = vpop.f32.mrb[0].mxu0
    %273 = vmatprep.mubr.f32.mxu0 0.0
    %274 = vmatmul.mubr.f32.gmra.mrb[0].mxu0 %v140
    %v275 = vpop.f32.mrb[0].mxu0
    %v276 = vadd.f32 0.0, %v275
    %v277 = vpop.f32.mrb[0].mxu0
    %278 = vmatprep.mubr.f32.mxu0 0.0
    %279 = vmatmul.mubr.f32.gmra.mrb[0].mxu0 %v143
    %v280 = vpop.f32.mrb[0].mxu0
    %v281 = vadd.f32 0.0, %v280
    %v282 = vpop.f32.mrb[0].mxu0
    %283 = vmatprep.mubr.f32.mxu0 0.0
    %284 = vmatmul.mubr.f32.gmra.mrb[0].mxu0 %v146
    %v285 = vpop.f32.mrb[0].mxu0
    %v286 = vadd.f32 0.0, %v285
    %v287 = vpop.f32.mrb[0].mxu0
    %288 = vmatprep.mubr.f32.mxu0 0.0
    %289 = vmatmul.mubr.f32.gmra.mrb[0].mxu0 %v149
    %v290 = vpop.f32.mrb[0].mxu0
    %v291 = vadd.f32 0.0, %v290
    %v292 = vpop.f32.mrb[0].mxu0
    %293 = vmatprep.mubr.f32.mxu0 0.0
    %294 = vmatmul.mubr.f32.gmra.mrb[0].mxu0 %v152
    %v295 = vpop.f32.mrb[0].mxu0
    %v296 = vadd.f32 0.0, %v295
    %v297 = vpop.f32.mrb[0].mxu0
    %298 = vdwg.mxu0
    %v299 = vadd.f32 %v89, %v221
    %v300 = vadd.f32 %v90, %v226
    %v301 = vadd.f32 %v91, %v231
    %v302 = vadd.f32 %v92, %v236
    %v303 = vadd.f32 %v93, %v241
    %v304 = vadd.f32 %v94, %v246
    %v305 = vadd.f32 %v95, %v251
    %v306 = vadd.f32 %v96, %v256
    %v307 = vadd.f32 %v97, %v261
    %v308 = vadd.f32 %v98, %v266
    %v309 = vadd.f32 %v99, %v271
    %v310 = vadd.f32 %v100, %v276
    %v311 = vadd.f32 %v101, %v281
    %v312 = vadd.f32 %v102, %v286
    %v313 = vadd.f32 %v103, %v291
    %v314 = vadd.f32 %v104, %v296
    %v315 = vxor.u32 %v299, 2147483648
    %v316 = vxor.u32 %v300, 2147483648
    %v317 = vxor.u32 %v301, 2147483648
    %v318 = vxor.u32 %v302, 2147483648
    %v319 = vxor.u32 %v303, 2147483648
    %v320 = vxor.u32 %v304, 2147483648
    %v321 = vxor.u32 %v305, 2147483648
    %v322 = vxor.u32 %v306, 2147483648
    %v323 = vxor.u32 %v307, 2147483648
    %v324 = vxor.u32 %v308, 2147483648
    %v325 = vxor.u32 %v309, 2147483648
    %v326 = vxor.u32 %v310, 2147483648
    %v327 = vmul.f32 %v315, 1.442695
    %v328 = vpow.pop %v327
    %v329 = vmul.f32 %v316, 1.442695
    %v330 = vpow.pop %v329
    %v331 = vmul.f32 %v317, 1.442695
    %v332 = vpow.pop %v331
    %v333 = vmul.f32 %v318, 1.442695
    %v334 = vpow.pop %v333
    %v335 = vmul.f32 %v319, 1.442695
    %v336 = vpow.pop %v335
    %v337 = vmul.f32 %v320, 1.442695
    %v338 = vpow.pop %v337
    %v339 = vmul.f32 %v321, 1.442695
    %v340 = vpow.pop %v339
    %v341 = vmul.f32 %v322, 1.442695
    %v342 = vpow.pop %v341
    %v343 = vmul.f32 %v323, 1.442695
    %v344 = vpow.pop %v343
    %v345 = vmul.f32 %v324, 1.442695
    %v346 = vpow.pop %v345
    %v347 = vmul.f32 %v325, 1.442695
    %v348 = vpow.pop %v347
    %v349 = vmul.f32 %v326, 1.442695
    %v350 = vpow.pop %v349
    %v351 = vadd.f32 %v328, 1.0
    %v352 = vadd.f32 %v330, 1.0
    %v353 = vadd.f32 %v332, 1.0
    %v354 = vadd.f32 %v334, 1.0
    %v355 = vadd.f32 %v336, 1.0
    %v356 = vadd.f32 %v338, 1.0
    %v357 = vadd.f32 %v340, 1.0
    %v358 = vadd.f32 %v342, 1.0
    %v359 = vadd.f32 %v344, 1.0
    %v360 = vadd.f32 %v346, 1.0
    %v361 = vadd.f32 %v348, 1.0
    %v362 = vadd.f32 %v350, 1.0
    %v363 = vrcp.pop %v351
    %v364 = vmul.f32 1.0, %v363
    %v365 = vrcp.pop %v352
    %v366 = vmul.f32 1.0, %v365
    %v367 = vrcp.pop %v353
    %v368 = vmul.f32 1.0, %v367
    %v369 = vrcp.pop %v354
    %v370 = vmul.f32 1.0, %v369
    %v371 = vrcp.pop %v355
    %v372 = vmul.f32 1.0, %v371
    %v373 = vrcp.pop %v356
    %v374 = vmul.f32 1.0, %v373
    %v375 = vrcp.pop %v357
    %v376 = vmul.f32 1.0, %v375
    %v377 = vrcp.pop %v358
    %v378 = vmul.f32 1.0, %v377
    %v379 = vrcp.pop %v359
    %v380 = vmul.f32 1.0, %v379
    %v381 = vrcp.pop %v360
    %v382 = vmul.f32 1.0, %v381
    %v383 = vrcp.pop %v361
    %v384 = vmul.f32 1.0, %v383
    %v385 = vrcp.pop %v362
    %v386 = vmul.f32 1.0, %v385
    %v387 = vtanh.pop %v311
    %v388 = vtanh.pop %v312
    %v389 = vtanh.pop %v313
    %v390 = vtanh.pop %v314
    %v391 = vmul.f32 %v372, %v79
    %v392 = vmul.f32 %v374, %v80
    %v393 = vmul.f32 %v376, %v81
    %v394 = vmul.f32 %v378, %v82
    %v395 = vmul.f32 %v364, %v387
    %v396 = vmul.f32 %v366, %v388
    %v397 = vmul.f32 %v368, %v389
    %v398 = vmul.f32 %v370, %v390
    %v399 = vadd.f32 %v391, %v395
    %v400 = vadd.f32 %v392, %v396
    %v401 = vadd.f32 %v393, %v397
    %v402 = vadd.f32 %v394, %v398
    %v403 = vtanh.pop %v399
    %v404 = vtanh.pop %v400
    %v405 = vtanh.pop %v401
    %v406 = vtanh.pop %v402
    %v407 = vmul.f32 %v380, %v403
    %v408 = vmul.f32 %v382, %v404
    %v409 = vmul.f32 %v384, %v405
    %v410 = vmul.f32 %v386, %v406
    %s411 = sadd.s32 %s50, %s70
    %s412 = sadd.s32 %s411, 1
    %v413 = vstv %s412
    %vm414 = vcmp.eq.s32.totalorder %v33, %v413
    %v415 = vsel %vm414, 1, 0
    %v416 = vlaneseq
    %v417 = vshrl.u32 %v416, 7
    %v418 = vsub.s32 0, %v417
    %v419 = vrot.slane %v415, %v418
    %vm420 = vcmp.eq.s32.totalorder %v419, 1
    %v421 = vsel %vm420, %v407, %v83
    %v422 = vsel %vm420, %v408, %v84
    %v423 = vsel %vm420, %v409, %v85
    %v424 = vsel %vm420, %v410, %v86
  $region22: #{tpu_custom_call.1} parent=0 // loop_footer
    %s72 = sadd.s32 %s70, 1
  $region23: #{tpu_custom_call.1} parent=0 // loop_footer_branch
    %69 = sbr.rel target = $region19
  $region24: #{tpu_custom_call.1} parent=0 // loop_exit
    _
  %vm425 = vcmask 64512
  %426 = vst.msk [vmem:[#allocation2] sm:$0xff] %vm425, %v75
  %427 = vst.msk [vmem:[#allocation2 + $0x8] sm:$0xff] %vm425, %v76
  %428 = vst.msk [vmem:[#allocation2 + $0x10] sm:$0xff] %vm425, %v77
  %429 = vst.msk [vmem:[#allocation2 + $0x18] sm:$0xff] %vm425, %v78
  %430 = vst.msk [vmem:[#allocation3] sm:$0xff] %vm425, %v79
  %431 = vst.msk [vmem:[#allocation3 + $0x8] sm:$0xff] %vm425, %v80
  %432 = vst.msk [vmem:[#allocation3 + $0x10] sm:$0xff] %vm425, %v81
  %433 = vst.msk [vmem:[#allocation3 + $0x18] sm:$0xff] %vm425, %v82
  %434 = vst.msk [vmem:[%s4] sm:$0xff] %vm425, %v83
  %435 = vst.msk [vmem:[%s4 + $0x8] sm:$0xff] %vm425, %v84
  %436 = vst.msk [vmem:[%s4 + $0x10] sm:$0xff] %vm425, %v85
  %437 = vst.msk [vmem:[%s4 + $0x18] sm:$0xff] %vm425, %v86
  // Predicated region
  $region25: #{tpu_custom_call.1} parent=0 // pred_check
    _
  $region26: #{tpu_custom_call.1} parent=0 // pred_check_branch
    %439 = sbr.rel (0) target = $region28
  $region27: #{tpu_custom_call.1} parent=0 // pred_region
    _
  $region28: #{tpu_custom_call.1} parent=0 // pred_fallthru
    _
  // Predicated region
  $region29: #{tpu_custom_call.1} parent=0 // pred_check
    _
  $region30: #{tpu_custom_call.1} parent=0 // pred_check_branch
    %441 = sbr.rel (0) target = $region32
  $region31: #{tpu_custom_call.1} parent=0 // pred_region
    _
  $region32: #{tpu_custom_call.1} parent=0 // pred_fallthru
    _

</llo_original>
